<compile_context>
chip_gen: v5e
topology: v5e:2x2
jax: 0.10.0
libtpu: 0.0.40
codegen_flags: <defaults>
</compile_context>

<pallas_src>
import numpy as np
import jax
import jax.numpy as jnp
from jax.experimental import pallas as pl
from jax.experimental.pallas import tpu as pltpu


# ----------------------------------------------------------------------------
# FIR kernel construction (host-side, numpy) — mirrors torch make_kernel.
# ----------------------------------------------------------------------------
def make_kernel_np(k):
    k = np.asarray(k, dtype=np.float64)
    if k.ndim == 1:
        k = np.outer(k, k)
    k = k / k.sum()
    return k.astype(np.float32)


def _tile_bytes(rows, cols, itemsize, leading=1):
    """Conservative VMEM footprint of a (leading, rows, cols) block after
    (sublane, lane) tile padding."""
    sublane = {4: 8, 2: 16, 1: 32}.get(int(itemsize), 8)
    r = -(-int(rows) // sublane) * sublane
    c = -(-int(cols) // 128) * 128
    return int(leading) * r * c * int(itemsize)


# ----------------------------------------------------------------------------
# Pallas kernels
# ----------------------------------------------------------------------------
def make_blur_sep_kernel(taps_y, taps_x, crop, pads, Ho, Wo):
    """Separable FIR: fill padded f32 scratch, Kh-tap vertical pass into an
    acc scratch, Kw-tap horizontal pass into the output."""
    Kh, Kw = len(taps_y), len(taps_x)
    cr_t, cr_b, cr_l, cr_r = crop
    pd_t, pd_b, pd_l, pd_r = pads
    has_pad = bool(pd_t or pd_b or pd_l or pd_r)

    def kernel(x_ref, o_ref, xpad_ref, acc_ref):
        _, H, W = x_ref.shape
        Hc = H - cr_t - cr_b
        Wc = W - cr_l - cr_r
        # In-VMEM pad/crop + single upcast to f32 (no HBM padded copy).
        if has_pad:
            xpad_ref[...] = jnp.zeros_like(xpad_ref)
        xpad_ref[:, pd_t:pd_t + Hc, pd_l:pd_l + Wc] = (
            x_ref[:, cr_t:cr_t + Hc, cr_l:cr_l + Wc].astype(xpad_ref.dtype))
        # Vertical pass: Ref-sliced taps (plain offset vector loads).
        acc = xpad_ref[:, 0:Ho, :] * taps_y[0]
        for ky in range(1, Kh):
            acc = acc + xpad_ref[:, ky:ky + Ho, :] * taps_y[ky]
        acc_ref[...] = acc
        # Horizontal pass: Ref-sliced taps of the acc scratch.
        out = acc_ref[:, :, 0:Wo] * taps_x[0]
        for kx in range(1, Kw):
            out = out + acc_ref[:, :, kx:kx + Wo] * taps_x[kx]
        o_ref[...] = out.astype(o_ref.dtype)

    return kernel


def make_blur_dense_kernel(taps_np, crop, pads, Ho, Wo):
    """General (non-separable) Kh x Kw tap-weighted sum (fallback path)."""
    Kh, Kw = taps_np.shape
    cr_t, cr_b, cr_l, cr_r = crop
    pd_t, pd_b, pd_l, pd_r = pads
    has_pad = bool(pd_t or pd_b or pd_l or pd_r)

    def kernel(x_ref, o_ref, xpad_ref, acc_ref):
        del acc_ref  # unused on the dense path
        _, H, W = x_ref.shape
        Hc = H - cr_t - cr_b
        Wc = W - cr_l - cr_r
        if has_pad:
            xpad_ref[...] = jnp.zeros_like(xpad_ref)
        xpad_ref[:, pd_t:pd_t + Hc, pd_l:pd_l + Wc] = (
            x_ref[:, cr_t:cr_t + Hc, cr_l:cr_l + Wc].astype(xpad_ref.dtype))
        out = None
        for ky in range(Kh):
            for kx in range(Kw):
                term = xpad_ref[:, ky:ky + Ho, kx:kx + Wo] * float(taps_np[ky, kx])
                out = term if out is None else out + term
        o_ref[...] = out.astype(o_ref.dtype)

    return kernel


# ----------------------------------------------------------------------------
# Blur module (Pallas port of the PyTorch Blur)
# ----------------------------------------------------------------------------
class Blur:
    """forward(x) == upfirdn2d(x, make_kernel(kernel) * factor**2, pad=pad)."""

    def __init__(self, kernel, pad, upsample_factor=1):
        self.pad = (int(pad[0]), int(pad[1]))
        k1 = np.asarray(kernel, dtype=np.float64)
        k2d = make_kernel_np(kernel)
        if upsample_factor > 1:
            k2d = k2d * (upsample_factor ** 2)
        self._k2d_np = k2d
        self.k2d = jnp.asarray(k2d, jnp.float32)              # for reference use
        self._separable = (k1.ndim == 1)
        if self._separable:
            t = k1 / k1.sum()
            if upsample_factor > 1:
                t = t * upsample_factor                       # per pass; total = factor**2
            # upfirdn2d convolves with the *flipped* kernel;
            # flip(outer(a, a)) == outer(flip(a), flip(a)).
            self._taps_1d = tuple(float(v) for v in np.flip(t))
        self._fwd = jax.jit(self._forward)

    def _forward(self, x):
        B, C, H, W = x.shape
        p0, p1 = self.pad
        Kh, Kw = self._k2d_np.shape

        # Negative pad -> crop of the raw input; positive pad -> in-VMEM zeros.
        cr_t = cr_l = max(-p0, 0)
        cr_b = cr_r = max(-p1, 0)
        pd_t = pd_l = max(p0, 0)
        pd_b = pd_r = max(p1, 0)
        Hc, Wc = H - cr_t - cr_b, W - cr_l - cr_r
        Hp, Wp = Hc + pd_t + pd_b, Wc + pd_l + pd_r
        Ho, Wo = Hp - Kh + 1, Wp - Kw + 1
        assert Ho > 0 and Wo > 0

        # Fold batch into the plane axis (free reshape for contiguous NCHW).
        N = B * C
        x2 = x.reshape(N, H, W)
        itemsize = int(x.dtype.itemsize)

        # Generation-aware VMEM budgeting (v7x: 64 MiB/TC, v5e/v6e: 128 MiB).
        try:
            vmem_cap = int(pltpu.get_tpu_info().vmem_capacity_bytes)
        except Exception:
            vmem_cap = 64 << 20                               # conservative (v7x)
        tile_budget = min(32 << 20, vmem_cap // 2)

        per_plane = (2 * _tile_bytes(H, W, itemsize)          # double-buffered in
                     + 2 * _tile_bytes(Ho, Wo, itemsize)      # double-buffered out
                     + _tile_bytes(Hp, Wp, 4)                 # padded f32 scratch
                     + _tile_bytes(Ho, Wp, 4))                # vertical-pass scratch
        divisors = [d for d in range(1, N + 1) if N % d == 0]
        ct = 1
        for d in divisors:
            if d * per_plane <= tile_budget:
                ct = d
        # Keep >= 2 grid steps when possible so v7x's two TCs both get work.
        if N >= 2 and N // ct < 2:
            ct = max(d for d in divisors if d <= N // 2)
        # TODO(synk): row-tile H with a (Kh-1)-row halo when a single plane
        # exceeds the per-buffer budget (beyond ~2K x 2K on v7x's 64 MiB VMEM).

        vmem_limit = int(min(vmem_cap - (8 << 20),
                             max(16 << 20, ct * per_plane + (4 << 20))))

        crop = (cr_t, cr_b, cr_l, cr_r)
        pads = (pd_t, pd_b, pd_l, pd_r)
        if self._separable:
            kernel_fn = make_blur_sep_kernel(self._taps_1d, self._taps_1d,
                                             crop, pads, Ho, Wo)
        else:
            kernel_fn = make_blur_dense_kernel(np.flip(self._k2d_np, (0, 1)),
                                               crop, pads, Ho, Wo)

        # NOTE: if xprof shows exposed DMA latency on v5e/v6e, add
        # pipeline_mode=pl.Buffered(3) to the in_spec (ample VMEM headroom
        # there); keep default double-buffering on v7x near the 64 MiB cap.
        out = pl.pallas_call(
            kernel_fn,
            out_shape=jax.ShapeDtypeStruct((N, Ho, Wo), x.dtype),
            grid=(N // ct,),
            in_specs=[pl.BlockSpec((ct, H, W), lambda n: (n, 0, 0))],
            out_specs=pl.BlockSpec((ct, Ho, Wo), lambda n: (n, 0, 0)),
            scratch_shapes=[pltpu.VMEM((ct, Hp, Wp), jnp.float32),
                            pltpu.VMEM((ct, Ho, Wp), jnp.float32)],
            compiler_params=pltpu.CompilerParams(
                dimension_semantics=("parallel",),
                vmem_limit_bytes=vmem_limit),
        )(x2)
        return out.reshape(B, C, Ho, Wo)                      # free reshape, same dtype

    def __call__(self, x):
        return self._fwd(x)


# ----------------------------------------------------------------------------
# Plain-JAX reference (independent: uses XLA conv) for correctness checking.
# ----------------------------------------------------------------------------
def blur_reference(x, k2d, pad):
    p0, p1 = pad
    xp = jnp.pad(x.astype(jnp.float32),
                 ((0, 0), (0, 0),
                  (max(p0, 0), max(p1, 0)), (max(p0, 0), max(p1, 0))))
    xp = xp[:, :,
            max(-p0, 0): xp.shape[2] - max(-p1, 0),
            max(-p0, 0): xp.shape[3] - max(-p1, 0)]
    B, C, Hp, Wp = xp.shape
    w = jnp.flip(k2d, (0, 1))[None, None, :, :]
    out = jax.lax.conv_general_dilated(
        xp.reshape(B * C, 1, Hp, Wp), w, window_strides=(1, 1),
        padding="VALID", dimension_numbers=("NCHW", "OIHW", "NCHW"))
    return out.reshape(B, C, out.shape[2], out.shape[3]).astype(x.dtype)


# ----------------------------------------------------------------------------
if __name__ == "__main__":
    key = jax.random.PRNGKey(0)
    B, C, H, W = 2, 4, 16, 16
    x = jax.random.normal(key, (B, C, H, W), jnp.float32)

    # StyleGAN2 post-conv-transpose blur: kernel [1,3,3,1], pad (2,1),
    # upsample_factor=2 (kernel scaled by 4).  Output stays (B, C, 16, 16).
    blur_up = Blur([1, 3, 3, 1], pad=(2, 1), upsample_factor=2)
    out_up = jax.block_until_ready(blur_up(x))
    ref_up = blur_reference(x, blur_up.k2d, blur_up.pad)
    assert out_up.shape == (B, C, 16, 16), out_up.shape
    assert out_up.dtype == x.dtype
    assert bool(jnp.all(jnp.isfinite(out_up)))
    assert bool(jnp.allclose(out_up, ref_up, atol=1e-5, rtol=1e-5))

    # Plain blur (no upsample scaling), pad (1,1) -> (B, C, 15, 15).
    blur_plain = Blur([1, 3, 3, 1], pad=(1, 1))
    out_plain = jax.block_until_ready(blur_plain(x))
    ref_plain = blur_reference(x, blur_plain.k2d, blur_plain.pad)
    assert out_plain.shape == ref_plain.shape
    assert bool(jnp.allclose(out_plain, ref_plain, atol=1e-5, rtol=1e-5))

    # Mixed positive/negative pad exercises the in-kernel crop path.
    blur_crop = Blur([1, 3, 3, 1], pad=(1, -1))
    out_crop = jax.block_until_ready(blur_crop(x))
    ref_crop = blur_reference(x, blur_crop.k2d, blur_crop.pad)
    assert out_crop.shape == ref_crop.shape
    assert bool(jnp.allclose(out_crop, ref_crop, atol=1e-5, rtol=1e-5))

    # bf16 activations stay bf16 end-to-end (no wrapper dtype round-trip).
    xb = x.astype(jnp.bfloat16)
    out_b = jax.block_until_ready(blur_plain(xb))
    ref_b = blur_reference(xb, blur_plain.k2d, blur_plain.pad)
    assert out_b.dtype == jnp.bfloat16
    assert bool(jnp.allclose(out_b.astype(jnp.float32),
                             ref_b.astype(jnp.float32), atol=2e-2, rtol=2e-2))

    print("KERNEL_OK")
</pallas_src>

<mosaic_0001>
module attributes {stable_mosaic.version = 11 : i64} {
  func.func @kernel(%arg0: i32, %arg1: memref<4x16x16xf32, #tpu.memory_space<vmem>>, %arg2: memref<4x16x16xf32, #tpu.memory_space<vmem>>, %arg3: memref<4x19x19xf32, #tpu.memory_space<vmem>>, %arg4: memref<4x16x19xf32, #tpu.memory_space<vmem>>) attributes {dimension_semantics = [#tpu.dimension_semantics<parallel>], iteration_bounds = array<i64: 2>, scalar_prefetch = 0 : i64, scratch_operands = 2 : i64, tpu.core_type = #tpu.core_type<tc>, window_params = [{transform_indices = @transform_0, window_bounds = array<i64: 4, 16, 16>}, {transform_indices = @transform_1, window_bounds = array<i64: 4, 16, 16>}]} {
    %cst = arith.constant 0.000000e+00 : f32
    %0 = vector.broadcast %cst : f32 to vector<4x19x19xf32>
    %c0 = arith.constant 0 : index
    %c0_0 = arith.constant 0 : index
    %c0_1 = arith.constant 0 : index
    %1 = vector.load %arg3[%c0, %c0_0, %c0_1] : memref<4x19x19xf32, #tpu.memory_space<vmem>>, vector<4x19x19xf32>
    tpu.vector_store %arg3[%c0, %c0_0, %c0_1], %0 {strides = array<i32>} : memref<4x19x19xf32, #tpu.memory_space<vmem>>, vector<4x19x19xf32>,
    %c0_2 = arith.constant 0 : index
    %c0_3 = arith.constant 0 : index
    %c0_4 = arith.constant 0 : index
    %2 = vector.load %arg1[%c0_2, %c0_3, %c0_4] : memref<4x16x16xf32, #tpu.memory_space<vmem>>, vector<4x16x16xf32>
    %c0_5 = arith.constant 0 : index
    %c2 = arith.constant 2 : index
    %c2_6 = arith.constant 2 : index
    %3 = vector.load %arg3[%c0_5, %c2, %c2_6] : memref<4x19x19xf32, #tpu.memory_space<vmem>>, vector<4x16x16xf32>
    tpu.vector_store %arg3[%c0_5, %c2, %c2_6], %2 {strides = array<i32>} : memref<4x19x19xf32, #tpu.memory_space<vmem>>, vector<4x16x16xf32>,
    %c0_7 = arith.constant 0 : index
    %c0_8 = arith.constant 0 : index
    %c0_9 = arith.constant 0 : index
    %4 = vector.load %arg3[%c0_7, %c0_8, %c0_9] : memref<4x19x19xf32, #tpu.memory_space<vmem>>, vector<4x16x19xf32>
    %cst_10 = arith.constant 2.500000e-01 : f32
    %5 = vector.broadcast %cst_10 : f32 to vector<4x16x19xf32>
    %6 = arith.mulf %4, %5 : vector<4x16x19xf32>
    %c0_11 = arith.constant 0 : index
    %c1 = arith.constant 1 : index
    %c0_12 = arith.constant 0 : index
    %7 = vector.load %arg3[%c0_11, %c1, %c0_12] : memref<4x19x19xf32, #tpu.memory_space<vmem>>, vector<4x16x19xf32>
    %cst_13 = arith.constant 7.500000e-01 : f32
    %8 = vector.broadcast %cst_13 : f32 to vector<4x16x19xf32>
    %9 = arith.mulf %7, %8 : vector<4x16x19xf32>
    %10 = arith.addf %6, %9 : vector<4x16x19xf32>
    %c0_14 = arith.constant 0 : index
    %c2_15 = arith.constant 2 : index
    %c0_16 = arith.constant 0 : index
    %11 = vector.load %arg3[%c0_14, %c2_15, %c0_16] : memref<4x19x19xf32, #tpu.memory_space<vmem>>, vector<4x16x19xf32>
    %cst_17 = arith.constant 7.500000e-01 : f32
    %12 = vector.broadcast %cst_17 : f32 to vector<4x16x19xf32>
    %13 = arith.mulf %11, %12 : vector<4x16x19xf32>
    %14 = arith.addf %10, %13 : vector<4x16x19xf32>
    %c0_18 = arith.constant 0 : index
    %c3 = arith.constant 3 : index
    %c0_19 = arith.constant 0 : index
    %15 = vector.load %arg3[%c0_18, %c3, %c0_19] : memref<4x19x19xf32, #tpu.memory_space<vmem>>, vector<4x16x19xf32>
    %cst_20 = arith.constant 2.500000e-01 : f32
    %16 = vector.broadcast %cst_20 : f32 to vector<4x16x19xf32>
    %17 = arith.mulf %15, %16 : vector<4x16x19xf32>
    %18 = arith.addf %14, %17 : vector<4x16x19xf32>
    %c0_21 = arith.constant 0 : index
    %c0_22 = arith.constant 0 : index
    %c0_23 = arith.constant 0 : index
    %19 = vector.load %arg4[%c0_21, %c0_22, %c0_23] : memref<4x16x19xf32, #tpu.memory_space<vmem>>, vector<4x16x19xf32>
    tpu.vector_store %arg4[%c0_21, %c0_22, %c0_23], %18 {strides = array<i32>} : memref<4x16x19xf32, #tpu.memory_space<vmem>>, vector<4x16x19xf32>,
    %c0_24 = arith.constant 0 : index
    %c0_25 = arith.constant 0 : index
    %c0_26 = arith.constant 0 : index
    %20 = vector.load %arg4[%c0_24, %c0_25, %c0_26] : memref<4x16x19xf32, #tpu.memory_space<vmem>>, vector<4x16x16xf32>
    %cst_27 = arith.constant 2.500000e-01 : f32
    %21 = vector.broadcast %cst_27 : f32 to vector<4x16x16xf32>
    %22 = arith.mulf %20, %21 : vector<4x16x16xf32>
    %c0_28 = arith.constant 0 : index
    %c0_29 = arith.constant 0 : index
    %c1_30 = arith.constant 1 : index
    %23 = vector.load %arg4[%c0_28, %c0_29, %c1_30] : memref<4x16x19xf32, #tpu.memory_space<vmem>>, vector<4x16x16xf32>
    %cst_31 = arith.constant 7.500000e-01 : f32
    %24 = vector.broadcast %cst_31 : f32 to vector<4x16x16xf32>
    %25 = arith.mulf %23, %24 : vector<4x16x16xf32>
    %26 = arith.addf %22, %25 : vector<4x16x16xf32>
    %c0_32 = arith.constant 0 : index
    %c0_33 = arith.constant 0 : index
    %c2_34 = arith.constant 2 : index
    %27 = vector.load %arg4[%c0_32, %c0_33, %c2_34] : memref<4x16x19xf32, #tpu.memory_space<vmem>>, vector<4x16x16xf32>
    %cst_35 = arith.constant 7.500000e-01 : f32
    %28 = vector.broadcast %cst_35 : f32 to vector<4x16x16xf32>
    %29 = arith.mulf %27, %28 : vector<4x16x16xf32>
    %30 = arith.addf %26, %29 : vector<4x16x16xf32>
    %c0_36 = arith.constant 0 : index
    %c0_37 = arith.constant 0 : index
    %c3_38 = arith.constant 3 : index
    %31 = vector.load %arg4[%c0_36, %c0_37, %c3_38] : memref<4x16x19xf32, #tpu.memory_space<vmem>>, vector<4x16x16xf32>
    %cst_39 = arith.constant 2.500000e-01 : f32
    %32 = vector.broadcast %cst_39 : f32 to vector<4x16x16xf32>
    %33 = arith.mulf %31, %32 : vector<4x16x16xf32>
    %34 = arith.addf %30, %33 : vector<4x16x16xf32>
    %c0_40 = arith.constant 0 : index
    %c0_41 = arith.constant 0 : index
    %c0_42 = arith.constant 0 : index
    %35 = vector.load %arg2[%c0_40, %c0_41, %c0_42] : memref<4x16x16xf32, #tpu.memory_space<vmem>>, vector<4x16x16xf32>
    tpu.vector_store %arg2[%c0_40, %c0_41, %c0_42], %34 {strides = array<i32>} : memref<4x16x16xf32, #tpu.memory_space<vmem>>, vector<4x16x16xf32>,
    return
  }
  func.func @transform_0(%arg0: i32) -> (i32, i32, i32) {
    %c0_i32 = arith.constant 0 : i32
    %c0_i32_0 = arith.constant 0 : i32
    %c0_i32_1 = arith.constant 0 : i32
    return %arg0, %c0_i32, %c0_i32_0 : i32, i32, i32
  }
  func.func @transform_1(%arg0: i32) -> (i32, i32, i32) {
    %c0_i32 = arith.constant 0 : i32
    %c0_i32_0 = arith.constant 0 : i32
    %c0_i32_1 = arith.constant 0 : i32
    return %arg0, %c0_i32, %c0_i32_0 : i32, i32, i32
  }
}

</mosaic_0001>

<llo_original>
// kernel: _forward.1
$region0: #{_forward.1}
  #allocation0 [shape = 'u32[]', space=smem, size = 0x4, offset = 0x4, fixed_abs, tag = 'smem constant byte address 0x4 - core index']
  #allocation1 [shape = 'u32[72,128]{1,0:T(1,128)}', space=vmem, size = 0x9000, scoped, tag = 'internal scratch']
  #allocation2 [shape = 'f32[4,19,19]{2,1,0:T(8,128)}', space=vmem, size = 0xc000, scoped, tag = 'scratch operand']
  #allocation3 [shape = 'f32[4,16,19]{2,1,0:T(8,128)}', space=vmem, size = 0x8000, scoped, tag = 'scratch operand']
  %s0 = inlined_call_operand.hbm [shape: f32[8,16,16], index: 0, kind: input, shape index: {}]
  %s1 = inlined_call_operand.hbm [shape: f32[8,16,16], index: 1, kind: output, shape index: {}]
  %s2 = sld [smem:[#allocation0]]
  $region41: #{_forward.1} parent=0
    _
  %s4 = ssub.s32 1, %s2
  %s5 = scalar_select 0, %s4, %s2
  $region1: #{_forward.1} parent=0
    #allocation4 [shape = 'u8[65536]{0}', space=vmem, size = 0x10000, scoped, tag = 'input window, operand 0']
    #allocation5 [shape = 's32[2]{0}', space=sflag, size = 0x8, scoped, tag = 'scoped memory for _forward.1']
    #allocation6 [shape = 's32[2]{0}', space=sflag, size = 0x8, scoped, tag = 'scoped memory for _forward.1']
    #allocation7 [shape = 'u8[65536]{0}', space=vmem, size = 0x10000, scoped, tag = 'output window, operand 0']
    %6 = vsyncpa [#allocation5], 0
    %s7 = scalar_lea.sflag [#allocation5], 1
    %8 = vsyncpa %s7, 0
    %9 = vsyncpa [#allocation6], 0
    %s10 = scalar_lea.sflag [#allocation6], 1
    %11 = vsyncpa %s10, 0
    loop: start=0, step=1, limit=4
    $region2: #{_forward.1} parent=1 // loop_pre_header
      _
    $region3: #{_forward.1} parent=1 // loop_header
      %s13 = sphi 0, %s17
      %p14 = scmp.ge.s32.totalorder %s13, 4
      %s23 = sphi 0, %s25
      %s26 = sphi 0, %s23
      %s27 = sphi 0, %s26
      %s43 = sphi 0, %s27
      %s49 = sphi 0, %s51
      %s52 = sphi 0, %s49
      %s53 = sphi 0, %s52
      %s69 = sphi 0, %s53
    $region4: #{_forward.1} parent=1 // loop_header_branch
      %16 = sbr.rel (%p14) target = $region8
    $region5: #{_forward.1} parent=1 // loop_body
      %s18 = ssub.s32 %s13, 1
      %s19 = ssub.s32 %s13, 2
      %s20 = sadd.s32 %s13, 1
      %s21 = ssub.s32 %s13, %s20
      %p22 = scmp.eq.s32.totalorder %s21, 0
      %s24 = sadd.s32 %s23, 1
      %s25 = scalar_select %p22, %s23, %s24
      %p28 = pneg %p22
      %p29 = scmp.eq.s32.totalorder %s13, 1
      %p30 = por %p28, %p29
      %p31 = scmp.ne.s32.totalorder %s23, %s26
      %p32 = scmp.eq.s32.totalorder %s13, 0
      %p33 = por %p31, %p32
      %p34 = scmp.ne.s32.totalorder %s23, %s26
      %p35 = scmp.eq.s32.totalorder %s18, 1
      %p36 = por %p34, %p35
      %p37 = scmp.ne.s32.totalorder %s26, %s27
      %p38 = scmp.eq.s32.totalorder %s18, 0
      %p39 = por %p37, %p38
      %p40 = scmp.ne.s32.totalorder %s26, %s27
      %p41 = scmp.eq.s32.totalorder %s19, 1
      %p42 = por %p40, %p41
      %p44 = scmp.ne.s32.totalorder %s27, %s43
      %p45 = scmp.eq.s32.totalorder %s19, 0
      %p46 = por %p44, %p45
      %s47 = ssub.s32 %s13, %s20
      %p48 = scmp.eq.s32.totalorder %s47, 0
      %s50 = sadd.s32 %s49, 1
      %s51 = scalar_select %p48, %s49, %s50
      %p54 = pneg %p48
      %p55 = scmp.eq.s32.totalorder %s13, 1
      %p56 = por %p54, %p55
      %p57 = scmp.ne.s32.totalorder %s49, %s52
      %p58 = scmp.eq.s32.totalorder %s13, 0
      %p59 = por %p57, %p58
      %p60 = scmp.ne.s32.totalorder %s49, %s52
      %p61 = scmp.eq.s32.totalorder %s18, 1
      %p62 = por %p60, %p61
      %p63 = scmp.ne.s32.totalorder %s52, %s53
      %p64 = scmp.eq.s32.totalorder %s18, 0
      %p65 = por %p63, %p64
      %p66 = scmp.ne.s32.totalorder %s52, %s53
      %p67 = scmp.eq.s32.totalorder %s19, 1
      %p68 = por %p66, %p67
      %p70 = scmp.ne.s32.totalorder %s53, %s69
      %p71 = scmp.eq.s32.totalorder %s19, 0
      %p72 = por %p70, %p71
      %p73 = scmp.le.s32.totalorder 1, %s13
      %p74 = scmp.lt.s32.totalorder %s13, 3
      %p75 = pnand %p73, %p74
      %p76 = pneg %p75
      // Predicated region
      $region9: #{_forward.1} parent=5 // pred_check
        _
      $region10: #{_forward.1} parent=5 // pred_check_branch
        %78 = sbr.rel (%p75) target = $region12
      $region11: #{_forward.1} parent=5 // pred_region
        %s79 = ssub.s32 %s13, 1
      $region12: #{_forward.1} parent=5 // pred_fallthru
        _
      %p80 = scmp.lt.s32.totalorder %s13, 2
      // Predicated region
      $region13: #{_forward.1} parent=5 // pred_check
        %p81 = pneg %p80
      $region14: #{_forward.1} parent=5 // pred_check_branch
        %83 = sbr.rel (%p81) target = $region16
      $region15: #{_forward.1} parent=5 // pred_region
        // Predicated region
        $region17: #{_forward.1} parent=15 // pred_check
          %p84 = pneg %p33
        $region18: #{_forward.1} parent=15 // pred_check_branch
          %86 = sbr.rel (%p84) target = $region20
        $region19: #{_forward.1} parent=15 // pred_region
          %s87 = sand.u32 %s23, 1
          %s88 = scalar_lea.sflag [#allocation5], %s87
          %s89 = sand.u32 %s23, 1
          %s90 = smul.addr %s89, 64
          %s91 = scalar_lea.vmem [#allocation4], %s90
          %s92 = smul.u32 4, %s13
          %94 = vsyncadd %s88, 0
          %s95 = smul.addr %s92, 2
          %s96 = smul.addr %s95, 8
          %s97 = scalar_lea.hbm %s0, %s96
          %s98 = sshll.u32 %s97, 4
          %s99 = int_to_ptr.hbm [resolvable:$true] %s98
          %s100 = sshll.u32 %s91, 4
          %s101 = int_to_ptr.vmem [resolvable:$true] %s100
          %106 = dma.hbm_to_vmem [thread:$0]  %s99, 1024, %s101, %s88, 128, 128, 8
        $region20: #{_forward.1} parent=15 // pred_fallthru
          _
      $region16: #{_forward.1} parent=5 // pred_fallthru
        _
      %p107 = scmp.le.s32.totalorder 1, %s13
      %p108 = scmp.lt.s32.totalorder %s13, 3
      %p109 = pnand %p107, %p108
      %p110 = pneg %p109
      // Predicated region
      $region21: #{_forward.1} parent=5 // pred_check
        _
      $region22: #{_forward.1} parent=5 // pred_check_branch
        %112 = sbr.rel (%p109) target = $region24
      $region23: #{_forward.1} parent=5 // pred_region
        %s113 = ssub.s32 %s13, 1
        %s114 = sand.u32 %s26, 1
        %s115 = scalar_lea.sflag [#allocation5], %s114
        %s116 = sand.u32 %s26, 1
        %s117 = smul.addr %s116, 64
        %s118 = scalar_lea.vmem [#allocation4], %s117
        // Predicated region
        $region25: #{_forward.1} parent=23 // pred_check
          %p119 = pneg %p39
        $region26: #{_forward.1} parent=23 // pred_check_branch
          %121 = sbr.rel (%p119) target = $region28
        $region27: #{_forward.1} parent=23 // pred_region
          %123 = dma.done %s115, 1024
        $region28: #{_forward.1} parent=23 // pred_fallthru
          _
        %s124 = sand.u32 %s26, 1
        %s125 = scalar_lea.sflag [#allocation5], %s124
        %s126 = sand.u32 %s26, 1
        %s127 = smul.addr %s126, 64
        %s128 = scalar_lea.vmem [#allocation4], %s127
        %p129 = pneg %p39
        %p130 = pneg %p36
        %p131 = pneg %p65
        %p132 = pneg %p62
        %s133 = sand.u32 %s52, 1
        %s134 = scalar_lea.sflag [#allocation6], %s133
        %s135 = sand.u32 %s52, 1
        %s136 = smul.addr %s135, 64
        %s137 = scalar_lea.vmem [#allocation7], %s136
        %s138 = smul.u32 4, %s18
        %s139 = smul.u32 4, %s18
        %vm140 = vcmask 154624
        %141 = vst.msk [vmem:[#allocation2] sm:$0xff] %vm140, 0.0
        %142 = vst.msk [vmem:[#allocation2 + $0x8] sm:$0xff] %vm140, 0.0
        %vm143 = vcmask 149504
        %144 = vst.msk [vmem:[#allocation2 + $0x10] sm:$0x7] %vm143, 0.0
        %145 = vst.msk [vmem:[#allocation2 + $0x18] sm:$0xff] %vm140, 0.0
        %146 = vst.msk [vmem:[#allocation2 + $0x20] sm:$0xff] %vm140, 0.0
        %147 = vst.msk [vmem:[#allocation2 + $0x28] sm:$0x7] %vm143, 0.0
        %148 = vst.msk [vmem:[#allocation2 + $0x30] sm:$0xff] %vm140, 0.0
        %149 = vst.msk [vmem:[#allocation2 + $0x38] sm:$0xff] %vm140, 0.0
        %150 = vst.msk [vmem:[#allocation2 + $0x40] sm:$0x7] %vm143, 0.0
        %151 = vst.msk [vmem:[#allocation2 + $0x48] sm:$0xff] %vm140, 0.0
        %152 = vst.msk [vmem:[#allocation2 + $0x50] sm:$0xff] %vm140, 0.0
        %153 = vst.msk [vmem:[#allocation2 + $0x58] sm:$0x7] %vm143, 0.0
        %v154 = vld [vmem:[%s118] sm:$0xff]
        %v155 = vld [vmem:[%s118 + $0x8] sm:$0xff]
        %v156 = vld [vmem:[%s118 + $0x10] sm:$0xff]
        %v157 = vld [vmem:[%s118 + $0x18] sm:$0xff]
        %v158 = vld [vmem:[%s118 + $0x20] sm:$0xff]
        %v159 = vld [vmem:[%s118 + $0x28] sm:$0xff]
        %v160 = vld [vmem:[%s118 + $0x30] sm:$0xff]
        %v161 = vld [vmem:[%s118 + $0x38] sm:$0xff]
        %170 = vrot.lane.b32.xlu0 %v154, 2
        %v171 = vpop.permute.xlu0 %170
        %172 = vrot.lane.b32.xlu0 %v155, 2
        %v173 = vpop.permute.xlu0 %172
        %174 = vrot.lane.b32.xlu0 %v156, 2
        %v175 = vpop.permute.xlu0 %174
        %176 = vrot.lane.b32.xlu0 %v157, 2
        %v177 = vpop.permute.xlu0 %176
        %178 = vrot.lane.b32.xlu0 %v158, 2
        %v179 = vpop.permute.xlu0 %178
        %180 = vrot.lane.b32.xlu0 %v159, 2
        %v181 = vpop.permute.xlu0 %180
        %182 = vrot.lane.b32.xlu0 %v160, 2
        %v183 = vpop.permute.xlu0 %182
        %184 = vrot.lane.b32.xlu0 %v161, 2
        %v185 = vpop.permute.xlu0 %184
        %vm194 = vcmask 146448
        %195 = vst.msk [vmem:[#allocation2 + $0x2] sm:$0xff] %vm194, %v171
        %196 = vst.msk [vmem:[#allocation2 + $0xa] sm:$0xff] %vm194, %v173
        %197 = vst.msk [vmem:[#allocation2 + $0x1a] sm:$0xff] %vm194, %v175
        %198 = vst.msk [vmem:[#allocation2 + $0x22] sm:$0xff] %vm194, %v177
        %199 = vst.msk [vmem:[#allocation2 + $0x32] sm:$0xff] %vm194, %v179
        %200 = vst.msk [vmem:[#allocation2 + $0x3a] sm:$0xff] %vm194, %v181
        %201 = vst.msk [vmem:[#allocation2 + $0x4a] sm:$0xff] %vm194, %v183
        %202 = vst.msk [vmem:[#allocation2 + $0x52] sm:$0xff] %vm194, %v185
        %v203 = vld [vmem:[#allocation2] sm:$0xff]
        %v204 = vld [vmem:[#allocation2 + $0x8] sm:$0xff]
        %v205 = vld [vmem:[#allocation2 + $0x18] sm:$0xff]
        %v206 = vld [vmem:[#allocation2 + $0x20] sm:$0xff]
        %v207 = vld [vmem:[#allocation2 + $0x30] sm:$0xff]
        %v208 = vld [vmem:[#allocation2 + $0x38] sm:$0xff]
        %v209 = vld [vmem:[#allocation2 + $0x48] sm:$0xff]
        %v210 = vld [vmem:[#allocation2 + $0x50] sm:$0xff]
        %v211 = vmul.f32 %v203, 0.25
        %v212 = vmul.f32 %v204, 0.25
        %v213 = vmul.f32 %v205, 0.25
        %v214 = vmul.f32 %v206, 0.25
        %v215 = vmul.f32 %v207, 0.25
        %v216 = vmul.f32 %v208, 0.25
        %v217 = vmul.f32 %v209, 0.25
        %v218 = vmul.f32 %v210, 0.25
        %v219 = vld [vmem:[#allocation2 + $0x1] sm:$0xff]
        %v220 = vld [vmem:[#allocation2 + $0x9] sm:$0xff]
        %v221 = vld [vmem:[#allocation2 + $0x19] sm:$0xff]
        %v222 = vld [vmem:[#allocation2 + $0x21] sm:$0xff]
        %v223 = vld [vmem:[#allocation2 + $0x31] sm:$0xff]
        %v224 = vld [vmem:[#allocation2 + $0x39] sm:$0xff]
        %v225 = vld [vmem:[#allocation2 + $0x49] sm:$0xff]
        %v226 = vld [vmem:[#allocation2 + $0x51] sm:$0xff]
        %v227 = vmul.f32 %v219, 0.75
        %v228 = vmul.f32 %v220, 0.75
        %v229 = vmul.f32 %v221, 0.75
        %v230 = vmul.f32 %v222, 0.75
        %v231 = vmul.f32 %v223, 0.75
        %v232 = vmul.f32 %v224, 0.75
        %v233 = vmul.f32 %v225, 0.75
        %v234 = vmul.f32 %v226, 0.75
        %v235 = vadd.f32 %v211, %v227
        %v236 = vadd.f32 %v212, %v228
        %v237 = vadd.f32 %v213, %v229
        %v238 = vadd.f32 %v214, %v230
        %v239 = vadd.f32 %v215, %v231
        %v240 = vadd.f32 %v216, %v232
        %v241 = vadd.f32 %v217, %v233
        %v242 = vadd.f32 %v218, %v234
        %v243 = vld [vmem:[#allocation2 + $0x2] sm:$0xff]
        %v244 = vld [vmem:[#allocation2 + $0xa] sm:$0xff]
        %v245 = vld [vmem:[#allocation2 + $0x1a] sm:$0xff]
        %v246 = vld [vmem:[#allocation2 + $0x22] sm:$0xff]
        %v247 = vld [vmem:[#allocation2 + $0x32] sm:$0xff]
        %v248 = vld [vmem:[#allocation2 + $0x3a] sm:$0xff]
        %v249 = vld [vmem:[#allocation2 + $0x4a] sm:$0xff]
        %v250 = vld [vmem:[#allocation2 + $0x52] sm:$0xff]
        %v251 = vmul.f32 %v243, 0.75
        %v252 = vmul.f32 %v244, 0.75
        %v253 = vmul.f32 %v245, 0.75
        %v254 = vmul.f32 %v246, 0.75
        %v255 = vmul.f32 %v247, 0.75
        %v256 = vmul.f32 %v248, 0.75
        %v257 = vmul.f32 %v249, 0.75
        %v258 = vmul.f32 %v250, 0.75
        %v259 = vadd.f32 %v235, %v251
        %v260 = vadd.f32 %v236, %v252
        %v261 = vadd.f32 %v237, %v253
        %v262 = vadd.f32 %v238, %v254
        %v263 = vadd.f32 %v239, %v255
        %v264 = vadd.f32 %v240, %v256
        %v265 = vadd.f32 %v241, %v257
        %v266 = vadd.f32 %v242, %v258
        %v267 = vld [vmem:[#allocation2 + $0x3] sm:$0xff]
        %v268 = vld [vmem:[#allocation2 + $0xb] sm:$0xff]
        %v269 = vld [vmem:[#allocation2 + $0x1b] sm:$0xff]
        %v270 = vld [vmem:[#allocation2 + $0x23] sm:$0xff]
        %v271 = vld [vmem:[#allocation2 + $0x33] sm:$0xff]
        %v272 = vld [vmem:[#allocation2 + $0x3b] sm:$0xff]
        %v273 = vld [vmem:[#allocation2 + $0x4b] sm:$0xff]
        %v274 = vld [vmem:[#allocation2 + $0x53] sm:$0xff]
        %v275 = vmul.f32 %v267, 0.25
        %v276 = vmul.f32 %v268, 0.25
        %v277 = vmul.f32 %v269, 0.25
        %v278 = vmul.f32 %v270, 0.25
        %v279 = vmul.f32 %v271, 0.25
        %v280 = vmul.f32 %v272, 0.25
        %v281 = vmul.f32 %v273, 0.25
        %v282 = vmul.f32 %v274, 0.25
        %v283 = vadd.f32 %v259, %v275
        %v284 = vadd.f32 %v260, %v276
        %v285 = vadd.f32 %v261, %v277
        %v286 = vadd.f32 %v262, %v278
        %v287 = vadd.f32 %v263, %v279
        %v288 = vadd.f32 %v264, %v280
        %v289 = vadd.f32 %v265, %v281
        %v290 = vadd.f32 %v266, %v282
        %291 = vst.msk [vmem:[#allocation3] sm:$0xff] %vm140, %v283
        %292 = vst.msk [vmem:[#allocation3 + $0x8] sm:$0xff] %vm140, %v284
        %293 = vst.msk [vmem:[#allocation3 + $0x10] sm:$0xff] %vm140, %v285
        %294 = vst.msk [vmem:[#allocation3 + $0x18] sm:$0xff] %vm140, %v286
        %295 = vst.msk [vmem:[#allocation3 + $0x20] sm:$0xff] %vm140, %v287
        %296 = vst.msk [vmem:[#allocation3 + $0x28] sm:$0xff] %vm140, %v288
        %297 = vst.msk [vmem:[#allocation3 + $0x30] sm:$0xff] %vm140, %v289
        %298 = vst.msk [vmem:[#allocation3 + $0x38] sm:$0xff] %vm140, %v290
        %v299 = vld [vmem:[#allocation3] sm:$0xff]
        %v300 = vld [vmem:[#allocation3 + $0x8] sm:$0xff]
        %v301 = vld [vmem:[#allocation3 + $0x10] sm:$0xff]
        %v302 = vld [vmem:[#allocation3 + $0x18] sm:$0xff]
        %v303 = vld [vmem:[#allocation3 + $0x20] sm:$0xff]
        %v304 = vld [vmem:[#allocation3 + $0x28] sm:$0xff]
        %v305 = vld [vmem:[#allocation3 + $0x30] sm:$0xff]
        %v306 = vld [vmem:[#allocation3 + $0x38] sm:$0xff]
        %v307 = vmul.f32 %v299, 0.25
        %v308 = vmul.f32 %v300, 0.25
        %v309 = vmul.f32 %v301, 0.25
        %v310 = vmul.f32 %v302, 0.25
        %v311 = vmul.f32 %v303, 0.25
        %v312 = vmul.f32 %v304, 0.25
        %v313 = vmul.f32 %v305, 0.25
        %v314 = vmul.f32 %v306, 0.25
        %v315 = vmul.f32 %v299, 0.75
        %v316 = vmul.f32 %v300, 0.75
        %v317 = vmul.f32 %v301, 0.75
        %v318 = vmul.f32 %v302, 0.75
        %v319 = vmul.f32 %v303, 0.75
        %v320 = vmul.f32 %v304, 0.75
        %v321 = vmul.f32 %v305, 0.75
        %v322 = vmul.f32 %v306, 0.75
        %331 = vrot.lane.b32.xlu0 %v315, 127
        %v332 = vpop.permute.xlu0 %331
        %333 = vrot.lane.b32.xlu0 %v316, 127
        %v334 = vpop.permute.xlu0 %333
        %335 = vrot.lane.b32.xlu0 %v317, 127
        %v336 = vpop.permute.xlu0 %335
        %337 = vrot.lane.b32.xlu0 %v318, 127
        %v338 = vpop.permute.xlu0 %337
        %339 = vrot.lane.b32.xlu0 %v319, 127
        %v340 = vpop.permute.xlu0 %339
        %341 = vrot.lane.b32.xlu0 %v320, 127
        %v342 = vpop.permute.xlu0 %341
        %343 = vrot.lane.b32.xlu0 %v321, 127
        %v344 = vpop.permute.xlu0 %343
        %345 = vrot.lane.b32.xlu0 %v322, 127
        %v346 = vpop.permute.xlu0 %345
        %v355 = vadd.f32 %v307, %v332
        %v356 = vadd.f32 %v308, %v334
        %v357 = vadd.f32 %v309, %v336
        %v358 = vadd.f32 %v310, %v338
        %v359 = vadd.f32 %v311, %v340
        %v360 = vadd.f32 %v312, %v342
        %v361 = vadd.f32 %v313, %v344
        %v362 = vadd.f32 %v314, %v346
        %363 = vrot.lane.b32.xlu0 %v315, 126
        %v364 = vpop.permute.xlu0 %363
        %365 = vrot.lane.b32.xlu0 %v316, 126
        %v366 = vpop.permute.xlu0 %365
        %367 = vrot.lane.b32.xlu0 %v317, 126
        %v368 = vpop.permute.xlu0 %367
        %369 = vrot.lane.b32.xlu0 %v318, 126
        %v370 = vpop.permute.xlu0 %369
        %371 = vrot.lane.b32.xlu0 %v319, 126
        %v372 = vpop.permute.xlu0 %371
        %373 = vrot.lane.b32.xlu0 %v320, 126
        %v374 = vpop.permute.xlu0 %373
        %375 = vrot.lane.b32.xlu0 %v321, 126
        %v376 = vpop.permute.xlu0 %375
        %377 = vrot.lane.b32.xlu0 %v322, 126
        %v378 = vpop.permute.xlu0 %377
        %v387 = vadd.f32 %v355, %v364
        %v388 = vadd.f32 %v356, %v366
        %v389 = vadd.f32 %v357, %v368
        %v390 = vadd.f32 %v358, %v370
        %v391 = vadd.f32 %v359, %v372
        %v392 = vadd.f32 %v360, %v374
        %v393 = vadd.f32 %v361, %v376
        %v394 = vadd.f32 %v362, %v378
        %403 = vrot.lane.b32.xlu0 %v307, 125
        %v404 = vpop.permute.xlu0 %403
        %405 = vrot.lane.b32.xlu0 %v308, 125
        %v406 = vpop.permute.xlu0 %405
        %407 = vrot.lane.b32.xlu0 %v309, 125
        %v408 = vpop.permute.xlu0 %407
        %409 = vrot.lane.b32.xlu0 %v310, 125
        %v410 = vpop.permute.xlu0 %409
        %411 = vrot.lane.b32.xlu0 %v311, 125
        %v412 = vpop.permute.xlu0 %411
        %413 = vrot.lane.b32.xlu0 %v312, 125
        %v414 = vpop.permute.xlu0 %413
        %415 = vrot.lane.b32.xlu0 %v313, 125
        %v416 = vpop.permute.xlu0 %415
        %417 = vrot.lane.b32.xlu0 %v314, 125
        %v418 = vpop.permute.xlu0 %417
        %v427 = vadd.f32 %v387, %v404
        %v428 = vadd.f32 %v388, %v406
        %v429 = vadd.f32 %v389, %v408
        %v430 = vadd.f32 %v390, %v410
        %v431 = vadd.f32 %v391, %v412
        %v432 = vadd.f32 %v392, %v414
        %v433 = vadd.f32 %v393, %v416
        %v434 = vadd.f32 %v394, %v418
        %vm435 = vcmask 130048
        %436 = vst.msk [vmem:[%s137] sm:$0xff] %vm435, %v427
        %437 = vst.msk [vmem:[%s137 + $0x8] sm:$0xff] %vm435, %v428
        %438 = vst.msk [vmem:[%s137 + $0x10] sm:$0xff] %vm435, %v429
        %439 = vst.msk [vmem:[%s137 + $0x18] sm:$0xff] %vm435, %v430
        %440 = vst.msk [vmem:[%s137 + $0x20] sm:$0xff] %vm435, %v431
        %441 = vst.msk [vmem:[%s137 + $0x28] sm:$0xff] %vm435, %v432
        %442 = vst.msk [vmem:[%s137 + $0x30] sm:$0xff] %vm435, %v433
        %443 = vst.msk [vmem:[%s137 + $0x38] sm:$0xff] %vm435, %v434
        %s444 = sand.u32 %s52, 1
        %s445 = scalar_lea.sflag [#allocation6], %s444
        %s446 = sand.u32 %s52, 1
        %s447 = smul.addr %s446, 64
        %s448 = scalar_lea.vmem [#allocation7], %s447
        // Predicated region
        $region29: #{_forward.1} parent=23 // pred_check
          %p449 = pneg %p62
        $region30: #{_forward.1} parent=23 // pred_check_branch
          %451 = sbr.rel (%p449) target = $region32
        $region31: #{_forward.1} parent=23 // pred_region
          %s452 = smul.u32 4, %s18
          %454 = vsyncadd %s445, 0
          %s455 = smul.addr %s452, 2
          %s456 = smul.addr %s455, 8
          %s457 = scalar_lea.hbm %s1, %s456
          %s458 = sshll.u32 %s448, 4
          %s459 = int_to_ptr.vmem [resolvable:$true] %s458
          %s460 = sshll.u32 %s457, 4
          %s461 = int_to_ptr.hbm [resolvable:$true] %s460
          %466 = dma.vmem_to_hbm [thread:$0]  %s459, 1024, %s461, %s445, 128, 128, 8
        $region32: #{_forward.1} parent=23 // pred_fallthru
          _
      $region24: #{_forward.1} parent=5 // pred_fallthru
        _
      %p467 = scmp.le.s32.totalorder 2, %s13
      // Predicated region
      $region33: #{_forward.1} parent=5 // pred_check
        %p468 = pneg %p467
      $region34: #{_forward.1} parent=5 // pred_check_branch
        %470 = sbr.rel (%p468) target = $region36
      $region35: #{_forward.1} parent=5 // pred_region
        %s471 = ssub.s32 %s13, 2
        // Predicated region
        $region37: #{_forward.1} parent=35 // pred_check
          %p472 = pneg %p68
        $region38: #{_forward.1} parent=35 // pred_check_branch
          %474 = sbr.rel (%p472) target = $region40
        $region39: #{_forward.1} parent=35 // pred_region
          %s475 = sand.u32 %s53, 1
          %s476 = scalar_lea.sflag [#allocation6], %s475
          %s477 = sand.u32 %s53, 1
          %s478 = smul.addr %s477, 64
          %s479 = scalar_lea.vmem [#allocation7], %s478
          %481 = dma.done %s476, 1024
        $region40: #{_forward.1} parent=35 // pred_fallthru
          _
      $region36: #{_forward.1} parent=5 // pred_fallthru
        _
    $region6: #{_forward.1} parent=1 // loop_footer
      %s17 = sadd.s32 1, %s13
    $region7: #{_forward.1} parent=1 // loop_footer_branch
      %12 = sbr.rel target = $region3
    $region8: #{_forward.1} parent=1 // loop_exit
      _
    %482 = vsyncpa [#allocation5], 1
    %s483 = scalar_lea.sflag [#allocation5], 1
    %484 = vsyncpa %s483, 1
    %485 = vsyncpa [#allocation6], 1
    %s486 = scalar_lea.sflag [#allocation6], 1
    %487 = vsyncpa %s486, 1

</llo_original>
